<compile_context>
chip_gen: v5e
topology: v5e:2x2
jax: 0.10.0
libtpu: 0.0.40
codegen_flags: <defaults>
</compile_context>

<pallas_src>
import math

import jax
import jax.numpy as jnp
from jax.experimental import pallas as pl
from jax.experimental.pallas import tpu as pltpu


def _round_up(x, m):
    return ((x + m - 1) // m) * m


def _make_kernel(num_hidden):
    """Fused per-(band, row-tile) kernel: num_hidden x [Linear -> Tanh], Linear, GLU."""

    def kernel(x_ref, *refs):
        out_ref = refs[-1]
        prm = refs[:-1]           # (w, b) per hidden layer, then (w_glu, b_glu)

        h = x_ref[0]              # (tm, dim), input dtype
        i = 0
        for _ in range(num_hidden):
            w = prm[i][0]         # (d_in, dim_hidden)
            b = prm[i + 1][0]     # (1, dim_hidden)
            i += 2
            y = jnp.dot(h.astype(w.dtype), w, preferred_element_type=jnp.float32)
            h = jnp.tanh(y + b.astype(jnp.float32))

        w = prm[i][0]             # (d_last, 2P): value lanes [0,P), gate lanes [P,2P)
        b = prm[i + 1][0]         # (1, 2P)
        y = jnp.dot(h.astype(w.dtype), w, preferred_element_type=jnp.float32)
        y = y + b.astype(jnp.float32)
        half = y.shape[-1] // 2   # multiple of 128 -> lane-aligned (free) slice
        val = y[:, :half]
        gate = y[:, half:]
        out_ref[0] = (val * jax.nn.sigmoid(gate)).astype(out_ref.dtype)

    return kernel


def mask_estimator_forward(x, band_params, *, row_tile=512, param_dtype=None):
    """x: (batch, seq, num_bands, dim).
    band_params: per band, list of (w, b) layers with w already (in, out) (transposed vs
    torch nn.Linear); the last layer's out-width is 2*dim_in_b (GLU).
    param_dtype: optionally cast weights (not biases) e.g. to jnp.bfloat16 for MXU speed.
    Returns (batch, seq, sum(dim_in_b))."""
    batch, seq, num_bands, dim = x.shape
    assert len(band_params) == num_bands
    depth = len(band_params[0])
    assert all(len(layers) == depth for layers in band_params)

    dim_inputs = [layers[-1][0].shape[1] // 2 for layers in band_params]
    P = _round_up(max(dim_inputs), 128)
    out_dtype = x.dtype

    # ---- stack per-band parameters on a leading band axis -------------------
    stacked_hidden = []
    for li in range(depth - 1):
        ws = jnp.stack([band_params[b][li][0] for b in range(num_bands)], axis=0)
        bs = jnp.stack([band_params[b][li][1].reshape(1, -1) for b in range(num_bands)],
                       axis=0)
        stacked_hidden.append((ws, bs))

    # Last (GLU) layer: value half -> lanes [0, P), gate half -> lanes [P, 2P).
    w_glu, b_glu = [], []
    for b in range(num_bands):
        w, bias = band_params[b][-1]
        di = dim_inputs[b]
        wv = jnp.pad(w[:, :di], ((0, 0), (0, P - di)))
        wg = jnp.pad(w[:, di:], ((0, 0), (0, P - di)))
        w_glu.append(jnp.concatenate([wv, wg], axis=1))
        bv = jnp.pad(bias[:di], (0, P - di))
        bg = jnp.pad(bias[di:], (0, P - di))
        b_glu.append(jnp.concatenate([bv, bg]).reshape(1, -1))
    w_glu = jnp.stack(w_glu, axis=0)            # (num_bands, d_last, 2P)
    b_glu = jnp.stack(b_glu, axis=0)            # (num_bands, 1, 2P)

    if param_dtype is not None:                 # bf16 weights: native MXU throughput
        stacked_hidden = [(w.astype(param_dtype), b) for (w, b) in stacked_hidden]
        w_glu = w_glu.astype(param_dtype)

    # ---- row tiling ---------------------------------------------------------
    M = batch * seq
    tm = row_tile if M >= row_tile else _round_up(M, 8)
    M_pad = _round_up(M, tm)
    # One strided copy to a band-major layout so every DMA block is a dense (tm, dim) tile.
    # TODO(synk): express this stride directly in the input BlockSpec (block (tm, 1, dim)
    # over the (M, num_bands, dim) view) to drop this transpose entirely.
    x_t = jnp.transpose(x, (2, 0, 1, 3)).reshape(num_bands, M, dim)
    if M_pad != M:
        x_t = jnp.pad(x_t, ((0, 0), (0, M_pad - M), (0, 0)))

    grid = (num_bands, M_pad // tm)             # bands outer -> weights DMA'd once/band

    operands = [x_t]
    in_specs = [pl.BlockSpec((1, tm, dim), lambda b, r: (b, r, 0))]

    def _wspec(arr):
        return pl.BlockSpec((1,) + tuple(arr.shape[1:]), lambda b, r: (b, 0, 0))

    for ws, bs in stacked_hidden:
        operands += [ws, bs]
        in_specs += [_wspec(ws), _wspec(bs)]
    operands += [w_glu, b_glu]
    in_specs += [_wspec(w_glu), _wspec(b_glu)]

    # ---- cost estimate / VMEM budget ----------------------------------------
    flops = 0
    weight_bytes = 0
    for ws, bs in stacked_hidden:
        flops += 2 * M_pad * num_bands * ws.shape[1] * ws.shape[2]
        weight_bytes += ws.size * ws.dtype.itemsize + bs.size * bs.dtype.itemsize
    flops += 2 * M_pad * num_bands * w_glu.shape[1] * w_glu.shape[2]
    weight_bytes += w_glu.size * w_glu.dtype.itemsize + b_glu.size * b_glu.dtype.itemsize

    dim_hidden = stacked_hidden[0][0].shape[2] if depth > 1 else 0
    transcendentals = M_pad * num_bands * ((depth - 1) * dim_hidden + P)
    out_itemsize = jnp.dtype(out_dtype).itemsize
    bytes_accessed = (x_t.size * x_t.dtype.itemsize
                      + num_bands * M_pad * P * out_itemsize
                      + weight_bytes)

    act_width = max(dim_hidden, 2 * P, dim)
    est_vmem = (2 * tm * dim * x_t.dtype.itemsize           # input double buffer
                + 2 * tm * P * out_itemsize                 # output double buffer
                + 2 * (weight_bytes // num_bands)           # per-band weights, double buffer
                + 4 * tm * act_width * 4)                   # f32 activation temporaries
    try:
        vmem_cap = int(pltpu.get_tpu_info().vmem_capacity_bytes)
    except Exception:
        vmem_cap = 64 * 1024 * 1024                         # conservative (v7x per-TC)
    # Never below the 32 MiB v6e default (fixes v5e's 16 MiB default), never above 75% of
    # physical VMEM (leaves headroom for pipeline buffers / compiler scratch on v7x).
    vmem_limit = int(min(max(2 * est_vmem + (8 << 20), 32 << 20), vmem_cap * 3 // 4))

    out_slab = pl.pallas_call(
        _make_kernel(depth - 1),
        out_shape=jax.ShapeDtypeStruct((num_bands, M_pad, P), out_dtype),
        grid_spec=pltpu.PrefetchScalarGridSpec(
            num_scalar_prefetch=0,
            grid=grid,
            in_specs=in_specs,
            out_specs=pl.BlockSpec((1, tm, P), lambda b, r: (b, r, 0)),
        ),
        compiler_params=pltpu.CompilerParams(
            dimension_semantics=("parallel", "parallel"),
            vmem_limit_bytes=vmem_limit),
        cost_estimate=pl.CostEstimate(
            flops=flops,
            transcendentals=transcendentals,
            bytes_accessed=bytes_accessed),
    )(*operands)

    # ---- compact the padded per-band slab into the concatenated output ------
    # TODO(synk): when some dim_in_b != P this is one residual XLA gather over the output;
    # a ragged (BoundedSlice) out_spec could write the packed layout directly.
    outs = [out_slab[b, :M, :dim_inputs[b]] for b in range(num_bands)]
    y = jnp.concatenate(outs, axis=-1)
    return y.reshape(batch, seq, -1)


def _reference(x, band_params):
    outs = []
    for b, layers in enumerate(band_params):
        h = x[..., b, :]
        for i, (w, bias) in enumerate(layers):
            h = h @ w + bias
            if i < len(layers) - 1:
                h = jnp.tanh(h)
        a, g = jnp.split(h, 2, axis=-1)
        outs.append(a * jax.nn.sigmoid(g))
    return jnp.concatenate(outs, axis=-1)


if __name__ == "__main__":
    key = jax.random.PRNGKey(0)
    batch, seq, dim = 2, 8, 32
    depth = 2
    mlp_expansion_factor = 4
    dim_hidden = dim * mlp_expansion_factor
    dim_inputs = (8, 12)          # per-band output widths (freq bins per band)
    num_bands = len(dim_inputs)

    x_key, key = jax.random.split(key)
    x = jax.random.normal(x_key, (batch, seq, num_bands, dim), dtype=jnp.float32)

    # Per-band MLP parameters, mimicking torch nn.Linear init (uniform +/- 1/sqrt(fan_in)),
    # weights stored transposed to (in, out).
    band_params = []
    for dim_in in dim_inputs:
        layers = []
        dims = (dim,) + (dim_hidden,) * (depth - 1) + (dim_in * 2,)
        for d_in, d_out in zip(dims[:-1], dims[1:]):
            kw, kb, key = jax.random.split(key, 3)
            lim = 1.0 / math.sqrt(d_in)
            w = jax.random.uniform(kw, (d_in, d_out), minval=-lim, maxval=lim,
                                   dtype=jnp.float32)
            b = jax.random.uniform(kb, (d_out,), minval=-lim, maxval=lim,
                                   dtype=jnp.float32)
            layers.append((w, b))
        band_params.append(layers)

    ref = _reference(x, band_params)

    # f32 weights: must match the reference tightly.
    out = jax.block_until_ready(mask_estimator_forward(x, band_params))
    assert out.shape == (batch, seq, sum(dim_inputs))
    assert jnp.allclose(out, ref, atol=1e-5, rtol=1e-5), "f32 mismatch vs reference"

    # bf16 weights (production fast path): same kernel, looser tolerance.
    out_bf16 = jax.block_until_ready(
        mask_estimator_forward(x, band_params, param_dtype=jnp.bfloat16))
    assert out_bf16.shape == (batch, seq, sum(dim_inputs))
    assert jnp.allclose(out_bf16, ref, atol=5e-2, rtol=0.0), "bf16 mismatch vs reference"

    print("KERNEL_OK")
</pallas_src>

<mosaic_0001>
module attributes {stable_mosaic.version = 11 : i64} {
  func.func @kernel(%arg0: i32, %arg1: i32, %arg2: memref<1x16x32xf32, #tpu.memory_space<vmem>>, %arg3: memref<1x32x128xf32, #tpu.memory_space<vmem>>, %arg4: memref<1x1x128xf32, #tpu.memory_space<vmem>>, %arg5: memref<1x128x256xf32, #tpu.memory_space<vmem>>, %arg6: memref<1x1x256xf32, #tpu.memory_space<vmem>>, %arg7: memref<1x16x128xf32, #tpu.memory_space<vmem>>) attributes {dimension_semantics = [#tpu.dimension_semantics<parallel>, #tpu.dimension_semantics<parallel>], iteration_bounds = array<i64: 2, 1>, scalar_prefetch = 0 : i64, scratch_operands = 0 : i64, tpu.core_type = #tpu.core_type<tc>, window_params = [{transform_indices = @transform_0, window_bounds = array<i64: 1, 16, 32>}, {transform_indices = @transform_1, window_bounds = array<i64: 1, 32, 128>}, {transform_indices = @transform_2, window_bounds = array<i64: 1, 1, 128>}, {transform_indices = @transform_3, window_bounds = array<i64: 1, 128, 256>}, {transform_indices = @transform_4, window_bounds = array<i64: 1, 1, 256>}, {transform_indices = @transform_5, window_bounds = array<i64: 1, 16, 128>}]} {
    %c0 = arith.constant 0 : index
    %c0_0 = arith.constant 0 : index
    %c0_1 = arith.constant 0 : index
    %0 = vector.load %arg2[%c0, %c0_0, %c0_1] : memref<1x16x32xf32, #tpu.memory_space<vmem>>, vector<1x16x32xf32>
    %1 = vector.shape_cast %0 : vector<1x16x32xf32> to vector<16x32xf32>
    %c0_2 = arith.constant 0 : index
    %c0_3 = arith.constant 0 : index
    %c0_4 = arith.constant 0 : index
    %2 = vector.load %arg3[%c0_2, %c0_3, %c0_4] : memref<1x32x128xf32, #tpu.memory_space<vmem>>, vector<1x32x128xf32>
    %3 = vector.shape_cast %2 : vector<1x32x128xf32> to vector<32x128xf32>
    %c0_5 = arith.constant 0 : index
    %c0_6 = arith.constant 0 : index
    %c0_7 = arith.constant 0 : index
    %4 = vector.load %arg4[%c0_5, %c0_6, %c0_7] : memref<1x1x128xf32, #tpu.memory_space<vmem>>, vector<1x1x128xf32>
    %5 = vector.shape_cast %4 : vector<1x1x128xf32> to vector<1x128xf32>
    %cst = arith.constant dense<0.000000e+00> : vector<16x128xf32>
    %6 = tpu.matmul %1, %3, %cst {dimension_numbers = #tpu.dot_dimension_numbers<[1], [0], [0], [1], [0, 0, 1, 1], [], []>} : vector<16x32xf32>, vector<32x128xf32>, vector<16x128xf32> -> vector<16x128xf32>
    %7 = vector.broadcast %5 : vector<1x128xf32> to vector<16x128xf32>
    %8 = arith.addf %6, %7 : vector<16x128xf32>
    %9 = math.tanh %8 : vector<16x128xf32>
    %c0_8 = arith.constant 0 : index
    %c0_9 = arith.constant 0 : index
    %c0_10 = arith.constant 0 : index
    %10 = vector.load %arg5[%c0_8, %c0_9, %c0_10] : memref<1x128x256xf32, #tpu.memory_space<vmem>>, vector<1x128x256xf32>
    %11 = vector.shape_cast %10 : vector<1x128x256xf32> to vector<128x256xf32>
    %c0_11 = arith.constant 0 : index
    %c0_12 = arith.constant 0 : index
    %c0_13 = arith.constant 0 : index
    %12 = vector.load %arg6[%c0_11, %c0_12, %c0_13] : memref<1x1x256xf32, #tpu.memory_space<vmem>>, vector<1x1x256xf32>
    %13 = vector.shape_cast %12 : vector<1x1x256xf32> to vector<1x256xf32>
    %cst_14 = arith.constant dense<0.000000e+00> : vector<16x256xf32>
    %14 = tpu.matmul %9, %11, %cst_14 {dimension_numbers = #tpu.dot_dimension_numbers<[1], [0], [0], [1], [0, 0, 1, 1], [], []>} : vector<16x128xf32>, vector<128x256xf32>, vector<16x256xf32> -> vector<16x256xf32>
    %15 = vector.broadcast %13 : vector<1x256xf32> to vector<16x256xf32>
    %16 = arith.addf %14, %15 : vector<16x256xf32>
    %17 = vector.extract_strided_slice %16 {offsets = [0, 0], sizes = [16, 128], strides = [1, 1]} : vector<16x256xf32> to vector<16x128xf32>
    %18 = vector.extract_strided_slice %16 {offsets = [0, 128], sizes = [16, 128], strides = [1, 1]} : vector<16x256xf32> to vector<16x128xf32>
    %19 = arith.negf %18 : vector<16x128xf32>
    %20 = math.exp %19 : vector<16x128xf32>
    %cst_15 = arith.constant 1.000000e+00 : f32
    %21 = vector.broadcast %cst_15 : f32 to vector<16x128xf32>
    %22 = arith.addf %21, %20 : vector<16x128xf32>
    %23 = arith.divf %21, %22 : vector<16x128xf32>
    %24 = arith.mulf %17, %23 : vector<16x128xf32>
    %c0_16 = arith.constant 0 : index
    %c0_17 = arith.constant 0 : index
    %c0_18 = arith.constant 0 : index
    %25 = vector.load %arg7[%c0_16, %c0_17, %c0_18] : memref<1x16x128xf32, #tpu.memory_space<vmem>>, vector<1x16x128xf32>
    %26 = vector.shape_cast %25 : vector<1x16x128xf32> to vector<16x128xf32>
    %27 = vector.shape_cast %24 : vector<16x128xf32> to vector<1x16x128xf32>
    tpu.vector_store %arg7[%c0_16, %c0_17, %c0_18], %27 {strides = array<i32>} : memref<1x16x128xf32, #tpu.memory_space<vmem>>, vector<1x16x128xf32>,
    return
  }
  func.func @transform_0(%arg0: i32, %arg1: i32) -> (i32, i32, i32) {
    %c0_i32 = arith.constant 0 : i32
    %c0_i32_0 = arith.constant 0 : i32
    return %arg0, %arg1, %c0_i32 : i32, i32, i32
  }
  func.func @transform_1(%arg0: i32, %arg1: i32) -> (i32, i32, i32) {
    %c0_i32 = arith.constant 0 : i32
    %c0_i32_0 = arith.constant 0 : i32
    %c0_i32_1 = arith.constant 0 : i32
    return %arg0, %c0_i32, %c0_i32_0 : i32, i32, i32
  }
  func.func @transform_2(%arg0: i32, %arg1: i32) -> (i32, i32, i32) {
    %c0_i32 = arith.constant 0 : i32
    %c0_i32_0 = arith.constant 0 : i32
    %c0_i32_1 = arith.constant 0 : i32
    return %arg0, %c0_i32, %c0_i32_0 : i32, i32, i32
  }
  func.func @transform_3(%arg0: i32, %arg1: i32) -> (i32, i32, i32) {
    %c0_i32 = arith.constant 0 : i32
    %c0_i32_0 = arith.constant 0 : i32
    %c0_i32_1 = arith.constant 0 : i32
    return %arg0, %c0_i32, %c0_i32_0 : i32, i32, i32
  }
  func.func @transform_4(%arg0: i32, %arg1: i32) -> (i32, i32, i32) {
    %c0_i32 = arith.constant 0 : i32
    %c0_i32_0 = arith.constant 0 : i32
    %c0_i32_1 = arith.constant 0 : i32
    return %arg0, %c0_i32, %c0_i32_0 : i32, i32, i32
  }
  func.func @transform_5(%arg0: i32, %arg1: i32) -> (i32, i32, i32) {
    %c0_i32 = arith.constant 0 : i32
    %c0_i32_0 = arith.constant 0 : i32
    return %arg0, %arg1, %c0_i32 : i32, i32, i32
  }
}

</mosaic_0001>

<llo_original>
// kernel: tpu_custom_call.1
$region0: #{tpu_custom_call.1}
  #allocation0 [shape = 'u32[]', space=smem, size = 0x4, offset = 0x4, fixed_abs, tag = 'smem constant byte address 0x4 - core index']
  #allocation1 [shape = 'u32[72,128]{1,0:T(1,128)}', space=vmem, size = 0x9000, scoped, tag = 'internal scratch']
  %s0 = inlined_call_operand.hbm [shape: f32[2,16,32], index: 0, kind: input, shape index: {}]
  %s1 = inlined_call_operand.hbm [shape: f32[2,32,128], index: 1, kind: input, shape index: {}]
  %s2 = inlined_call_operand.hbm [shape: f32[2,1,128], index: 2, kind: input, shape index: {}]
  %s3 = inlined_call_operand.hbm [shape: f32[2,128,256], index: 3, kind: input, shape index: {}]
  %s4 = inlined_call_operand.hbm [shape: f32[2,1,256], index: 4, kind: input, shape index: {}]
  %s5 = inlined_call_operand.hbm [shape: f32[2,16,128], index: 5, kind: output, shape index: {}]
  %s6 = sld [smem:[#allocation0]]
  $region73: #{tpu_custom_call.1} parent=0
    _
  %s8 = ssub.s32 1, %s6
  %s9 = scalar_select 0, %s8, %s6
  $region1: #{tpu_custom_call.1} parent=0
    #allocation2 [shape = 'u8[16384]{0}', space=vmem, size = 0x4000, scoped, tag = 'input window, operand 0']
    #allocation3 [shape = 's32[2]{0}', space=sflag, size = 0x8, scoped, tag = 'scoped memory for tpu_custom_call.1']
    #allocation4 [shape = 's32[2]{0}', space=sflag, size = 0x8, scoped, tag = 'scoped memory for tpu_custom_call.1']
    #allocation5 [shape = 'u8[32768]{0}', space=vmem, size = 0x8000, scoped, tag = 'input window, operand 1']
    #allocation6 [shape = 's32[2]{0}', space=sflag, size = 0x8, scoped, tag = 'scoped memory for tpu_custom_call.1']
    #allocation7 [shape = 'u8[1024]{0}', space=vmem, size = 0x400, scoped, tag = 'input window, operand 2']
    #allocation8 [shape = 'u8[262144]{0}', space=vmem, size = 0x40000, scoped, tag = 'input window, operand 3']
    #allocation9 [shape = 's32[2]{0}', space=sflag, size = 0x8, scoped, tag = 'scoped memory for tpu_custom_call.1']
    #allocation10 [shape = 'u8[2048]{0}', space=vmem, size = 0x800, scoped, tag = 'input window, operand 4']
    #allocation11 [shape = 'u8[16384]{0}', space=vmem, size = 0x4000, scoped, tag = 'output window, operand 0']
    %10 = vsyncpa [#allocation3], 0
    %s11 = scalar_lea.sflag [#allocation3], 1
    %12 = vsyncpa %s11, 0
    %13 = vsyncpa [#allocation6], 0
    %s14 = scalar_lea.sflag [#allocation6], 1
    %15 = vsyncpa %s14, 0
    %16 = vsyncpa [#allocation9], 0
    %s17 = scalar_lea.sflag [#allocation9], 1
    %18 = vsyncpa %s17, 0
    %19 = vsyncpa [#allocation4], 0
    %s20 = scalar_lea.sflag [#allocation4], 1
    %21 = vsyncpa %s20, 0
    loop: start=0, step=1, limit=4
    $region2: #{tpu_custom_call.1} parent=1 // loop_pre_header
      _
    $region3: #{tpu_custom_call.1} parent=1 // loop_header
      %s23 = sphi 0, %s27
      %p24 = scmp.ge.s32.totalorder %s23, 4
      %s30 = sphi 0, %s42
      %s31 = sphi 0, %s38
      %s32 = sphi 0, %s30
      %s33 = sphi 0, %s31
      %s34 = sphi 0, %s32
      %s35 = sphi 0, %s33
      %s47 = sphi 0, %s49
      %s50 = sphi 0, %s47
      %s51 = sphi 0, %s50
      %s67 = sphi 0, %s51
      %s73 = sphi 0, %s75
      %s76 = sphi 0, %s73
      %s77 = sphi 0, %s76
      %s93 = sphi 0, %s77
      %s99 = sphi 0, %s101
      %s102 = sphi 0, %s99
      %s103 = sphi 0, %s102
      %s119 = sphi 0, %s103
      %s125 = sphi 0, %s127
      %s128 = sphi 0, %s125
      %s129 = sphi 0, %s128
      %s145 = sphi 0, %s129
      %s151 = sphi 0, %s153
      %s154 = sphi 0, %s151
      %s155 = sphi 0, %s154
      %s171 = sphi 0, %s155
      %s179 = sphi 0, %s181
      %s182 = sphi 0, %s179
      %s183 = sphi 0, %s182
      %s199 = sphi 0, %s183
    $region4: #{tpu_custom_call.1} parent=1 // loop_header_branch
      %26 = sbr.rel (%p24) target = $region8
    $region5: #{tpu_custom_call.1} parent=1 // loop_body
      %s28 = ssub.s32 %s23, 1
      %s29 = ssub.s32 %s23, 2
      %s36 = sadd.s32 1, %s31
      %p37 = scmp.ge.s32.totalorder %s36, 1
      %s38 = scalar_select %p37, 0, %s36
      %s39 = sadd.s32 1, %s30
      %s40 = scalar_select %p37, %s39, %s30
      %p41 = scmp.ge.s32.totalorder %s40, 2
      %s42 = scalar_select %p41, 0, %s40
      %s43 = ssub.s32 %s30, %s42
      %s44 = ssub.s32 %s31, %s38
      %s45 = sor.u32 %s43, %s44
      %p46 = scmp.eq.s32.totalorder %s45, 0
      %s48 = sadd.s32 %s47, 1
      %s49 = scalar_select %p46, %s47, %s48
      %p52 = pneg %p46
      %p53 = scmp.eq.s32.totalorder %s23, 1
      %p54 = por %p52, %p53
      %p55 = scmp.ne.s32.totalorder %s47, %s50
      %p56 = scmp.eq.s32.totalorder %s23, 0
      %p57 = por %p55, %p56
      %p58 = scmp.ne.s32.totalorder %s47, %s50
      %p59 = scmp.eq.s32.totalorder %s28, 1
      %p60 = por %p58, %p59
      %p61 = scmp.ne.s32.totalorder %s50, %s51
      %p62 = scmp.eq.s32.totalorder %s28, 0
      %p63 = por %p61, %p62
      %p64 = scmp.ne.s32.totalorder %s50, %s51
      %p65 = scmp.eq.s32.totalorder %s29, 1
      %p66 = por %p64, %p65
      %p68 = scmp.ne.s32.totalorder %s51, %s67
      %p69 = scmp.eq.s32.totalorder %s29, 0
      %p70 = por %p68, %p69
      %s71 = ssub.s32 %s30, %s42
      %p72 = scmp.eq.s32.totalorder %s71, 0
      %s74 = sadd.s32 %s73, 1
      %s75 = scalar_select %p72, %s73, %s74
      %p78 = pneg %p72
      %p79 = scmp.eq.s32.totalorder %s23, 1
      %p80 = por %p78, %p79
      %p81 = scmp.ne.s32.totalorder %s73, %s76
      %p82 = scmp.eq.s32.totalorder %s23, 0
      %p83 = por %p81, %p82
      %p84 = scmp.ne.s32.totalorder %s73, %s76
      %p85 = scmp.eq.s32.totalorder %s28, 1
      %p86 = por %p84, %p85
      %p87 = scmp.ne.s32.totalorder %s76, %s77
      %p88 = scmp.eq.s32.totalorder %s28, 0
      %p89 = por %p87, %p88
      %p90 = scmp.ne.s32.totalorder %s76, %s77
      %p91 = scmp.eq.s32.totalorder %s29, 1
      %p92 = por %p90, %p91
      %p94 = scmp.ne.s32.totalorder %s77, %s93
      %p95 = scmp.eq.s32.totalorder %s29, 0
      %p96 = por %p94, %p95
      %s97 = ssub.s32 %s30, %s42
      %p98 = scmp.eq.s32.totalorder %s97, 0
      %s100 = sadd.s32 %s99, 1
      %s101 = scalar_select %p98, %s99, %s100
      %p104 = pneg %p98
      %p105 = scmp.eq.s32.totalorder %s23, 1
      %p106 = por %p104, %p105
      %p107 = scmp.ne.s32.totalorder %s99, %s102
      %p108 = scmp.eq.s32.totalorder %s23, 0
      %p109 = por %p107, %p108
      %p110 = scmp.ne.s32.totalorder %s99, %s102
      %p111 = scmp.eq.s32.totalorder %s28, 1
      %p112 = por %p110, %p111
      %p113 = scmp.ne.s32.totalorder %s102, %s103
      %p114 = scmp.eq.s32.totalorder %s28, 0
      %p115 = por %p113, %p114
      %p116 = scmp.ne.s32.totalorder %s102, %s103
      %p117 = scmp.eq.s32.totalorder %s29, 1
      %p118 = por %p116, %p117
      %p120 = scmp.ne.s32.totalorder %s103, %s119
      %p121 = scmp.eq.s32.totalorder %s29, 0
      %p122 = por %p120, %p121
      %s123 = ssub.s32 %s30, %s42
      %p124 = scmp.eq.s32.totalorder %s123, 0
      %s126 = sadd.s32 %s125, 1
      %s127 = scalar_select %p124, %s125, %s126
      %p130 = pneg %p124
      %p131 = scmp.eq.s32.totalorder %s23, 1
      %p132 = por %p130, %p131
      %p133 = scmp.ne.s32.totalorder %s125, %s128
      %p134 = scmp.eq.s32.totalorder %s23, 0
      %p135 = por %p133, %p134
      %p136 = scmp.ne.s32.totalorder %s125, %s128
      %p137 = scmp.eq.s32.totalorder %s28, 1
      %p138 = por %p136, %p137
      %p139 = scmp.ne.s32.totalorder %s128, %s129
      %p140 = scmp.eq.s32.totalorder %s28, 0
      %p141 = por %p139, %p140
      %p142 = scmp.ne.s32.totalorder %s128, %s129
      %p143 = scmp.eq.s32.totalorder %s29, 1
      %p144 = por %p142, %p143
      %p146 = scmp.ne.s32.totalorder %s129, %s145
      %p147 = scmp.eq.s32.totalorder %s29, 0
      %p148 = por %p146, %p147
      %s149 = ssub.s32 %s30, %s42
      %p150 = scmp.eq.s32.totalorder %s149, 0
      %s152 = sadd.s32 %s151, 1
      %s153 = scalar_select %p150, %s151, %s152
      %p156 = pneg %p150
      %p157 = scmp.eq.s32.totalorder %s23, 1
      %p158 = por %p156, %p157
      %p159 = scmp.ne.s32.totalorder %s151, %s154
      %p160 = scmp.eq.s32.totalorder %s23, 0
      %p161 = por %p159, %p160
      %p162 = scmp.ne.s32.totalorder %s151, %s154
      %p163 = scmp.eq.s32.totalorder %s28, 1
      %p164 = por %p162, %p163
      %p165 = scmp.ne.s32.totalorder %s154, %s155
      %p166 = scmp.eq.s32.totalorder %s28, 0
      %p167 = por %p165, %p166
      %p168 = scmp.ne.s32.totalorder %s154, %s155
      %p169 = scmp.eq.s32.totalorder %s29, 1
      %p170 = por %p168, %p169
      %p172 = scmp.ne.s32.totalorder %s155, %s171
      %p173 = scmp.eq.s32.totalorder %s29, 0
      %p174 = por %p172, %p173
      %s175 = ssub.s32 %s30, %s42
      %s176 = ssub.s32 %s31, %s38
      %s177 = sor.u32 %s175, %s176
      %p178 = scmp.eq.s32.totalorder %s177, 0
      %s180 = sadd.s32 %s179, 1
      %s181 = scalar_select %p178, %s179, %s180
      %p184 = pneg %p178
      %p185 = scmp.eq.s32.totalorder %s23, 1
      %p186 = por %p184, %p185
      %p187 = scmp.ne.s32.totalorder %s179, %s182
      %p188 = scmp.eq.s32.totalorder %s23, 0
      %p189 = por %p187, %p188
      %p190 = scmp.ne.s32.totalorder %s179, %s182
      %p191 = scmp.eq.s32.totalorder %s28, 1
      %p192 = por %p190, %p191
      %p193 = scmp.ne.s32.totalorder %s182, %s183
      %p194 = scmp.eq.s32.totalorder %s28, 0
      %p195 = por %p193, %p194
      %p196 = scmp.ne.s32.totalorder %s182, %s183
      %p197 = scmp.eq.s32.totalorder %s29, 1
      %p198 = por %p196, %p197
      %p200 = scmp.ne.s32.totalorder %s183, %s199
      %p201 = scmp.eq.s32.totalorder %s29, 0
      %p202 = por %p200, %p201
      %p203 = scmp.le.s32.totalorder 1, %s23
      %p204 = scmp.lt.s32.totalorder %s23, 3
      %p205 = pnand %p203, %p204
      %p206 = pneg %p205
      // Predicated region
      $region9: #{tpu_custom_call.1} parent=5 // pred_check
        _
      $region10: #{tpu_custom_call.1} parent=5 // pred_check_branch
        %208 = sbr.rel (%p205) target = $region12
      $region11: #{tpu_custom_call.1} parent=5 // pred_region
        %s209 = ssub.s32 %s23, 1
      $region12: #{tpu_custom_call.1} parent=5 // pred_fallthru
        _
      %p210 = scmp.lt.s32.totalorder %s23, 2
      // Predicated region
      $region13: #{tpu_custom_call.1} parent=5 // pred_check
        %p211 = pneg %p210
      $region14: #{tpu_custom_call.1} parent=5 // pred_check_branch
        %213 = sbr.rel (%p211) target = $region16
      $region15: #{tpu_custom_call.1} parent=5 // pred_region
        // Predicated region
        $region17: #{tpu_custom_call.1} parent=15 // pred_check
          %p214 = pneg %p57
        $region18: #{tpu_custom_call.1} parent=15 // pred_check_branch
          %216 = sbr.rel (%p214) target = $region20
        $region19: #{tpu_custom_call.1} parent=15 // pred_region
          %s217 = sand.u32 %s47, 1
          %s218 = scalar_lea.sflag [#allocation3], %s217
          %s219 = sand.u32 %s47, 1
          %s220 = smul.addr %s219, 16
          %s221 = scalar_lea.vmem [#allocation2], %s220
          %s222 = smul.u32 2, %s31
          %224 = vsyncadd %s218, 0
          %s225 = smul.addr %s30, 2
          %s226 = sadd.s32 %s222, %s225
          %s227 = smul.addr %s226, 8
          %s228 = scalar_lea.hbm %s0, %s227
          %s229 = sshll.u32 %s228, 4
          %s230 = int_to_ptr.hbm [resolvable:$true] %s229
          %s231 = sshll.u32 %s221, 4
          %s232 = int_to_ptr.vmem [resolvable:$true] %s231
          %237 = dma.hbm_to_vmem [thread:$0]  %s230, 256, %s232, %s218, 128, 128, 8
        $region20: #{tpu_custom_call.1} parent=15 // pred_fallthru
          _
        // Predicated region
        $region21: #{tpu_custom_call.1} parent=15 // pred_check
          %p238 = pneg %p83
        $region22: #{tpu_custom_call.1} parent=15 // pred_check_branch
          %240 = sbr.rel (%p238) target = $region24
        $region23: #{tpu_custom_call.1} parent=15 // pred_region
          %s241 = sand.u32 %s23, 1
          %s242 = scalar_lea.sflag [#allocation6], %s241
          %s243 = sand.u32 %s73, 1
          %s244 = smul.addr %s243, 32
          %s245 = scalar_lea.vmem [#allocation5], %s244
          %247 = vsyncadd %s242, 0
          %s248 = smul.addr %s30, 4
          %s249 = smul.addr %s248, 8
          %s250 = scalar_lea.hbm %s1, %s249
          %s251 = sshll.u32 %s250, 4
          %s252 = int_to_ptr.hbm [resolvable:$true] %s251
          %s253 = sshll.u32 %s245, 4
          %s254 = int_to_ptr.vmem [resolvable:$true] %s253
          %259 = dma.hbm_to_vmem [thread:$0]  %s252, 512, %s254, %s242, 128, 128, 8
        $region24: #{tpu_custom_call.1} parent=15 // pred_fallthru
          _
        // Predicated region
        $region25: #{tpu_custom_call.1} parent=15 // pred_check
          %p260 = pneg %p109
        $region26: #{tpu_custom_call.1} parent=15 // pred_check_branch
          %262 = sbr.rel (%p260) target = $region28
        $region27: #{tpu_custom_call.1} parent=15 // pred_region
          %s263 = sand.u32 %s23, 1
          %s264 = scalar_lea.sflag [#allocation6], %s263
          %s265 = sand.u32 %s99, 1
          %s266 = scalar_lea.vmem [#allocation7], %s265
          %268 = vsyncadd %s264, 0
          %s269 = scalar_lea.hbm %s2, %s30
          %s271 = sshll.u32 %s269, 4
          %s272 = int_to_ptr.hbm [resolvable:$true] %s271
          %s273 = sshll.u32 %s266, 4
          %s274 = int_to_ptr.vmem [resolvable:$true] %s273
          %276 = dma.hbm_to_vmem [thread:$0]  %s272, 16, %s274, %s264
        $region28: #{tpu_custom_call.1} parent=15 // pred_fallthru
          _
        // Predicated region
        $region29: #{tpu_custom_call.1} parent=15 // pred_check
          %p277 = pneg %p135
        $region30: #{tpu_custom_call.1} parent=15 // pred_check_branch
          %279 = sbr.rel (%p277) target = $region32
        $region31: #{tpu_custom_call.1} parent=15 // pred_region
          %s280 = sand.u32 %s23, 1
          %s281 = scalar_lea.sflag [#allocation9], %s280
          %s282 = sand.u32 %s125, 1
          %s283 = smul.addr %s282, 256
          %s284 = scalar_lea.vmem [#allocation8], %s283
          %286 = vsyncadd %s281, 0
          %s287 = smul.addr %s30, 32
          %s288 = smul.addr %s287, 8
          %s289 = scalar_lea.hbm %s3, %s288
          %s290 = sshll.u32 %s289, 4
          %s291 = int_to_ptr.hbm [resolvable:$true] %s290
          %s292 = sshll.u32 %s284, 4
          %s293 = int_to_ptr.vmem [resolvable:$true] %s292
          %298 = dma.hbm_to_vmem [thread:$0]  %s291, 4096, %s293, %s281, 256, 256, 16
        $region32: #{tpu_custom_call.1} parent=15 // pred_fallthru
          _
        // Predicated region
        $region33: #{tpu_custom_call.1} parent=15 // pred_check
          %p299 = pneg %p161
        $region34: #{tpu_custom_call.1} parent=15 // pred_check_branch
          %301 = sbr.rel (%p299) target = $region36
        $region35: #{tpu_custom_call.1} parent=15 // pred_region
          %s302 = sand.u32 %s23, 1
          %s303 = scalar_lea.sflag [#allocation9], %s302
          %s304 = sand.u32 %s151, 1
          %s305 = smul.addr %s304, 2
          %s306 = scalar_lea.vmem [#allocation10], %s305
          %308 = vsyncadd %s303, 0
          %s309 = smul.addr %s30, 2
          %s310 = scalar_lea.hbm %s4, %s309
          %s312 = sshll.u32 %s310, 4
          %s313 = int_to_ptr.hbm [resolvable:$true] %s312
          %s314 = sshll.u32 %s306, 4
          %s315 = int_to_ptr.vmem [resolvable:$true] %s314
          %317 = dma.hbm_to_vmem [thread:$0]  %s313, 32, %s315, %s303
        $region36: #{tpu_custom_call.1} parent=15 // pred_fallthru
          _
      $region16: #{tpu_custom_call.1} parent=5 // pred_fallthru
        _
      %p318 = scmp.le.s32.totalorder 1, %s23
      %p319 = scmp.lt.s32.totalorder %s23, 3
      %p320 = pnand %p318, %p319
      %p321 = pneg %p320
      // Predicated region
      $region37: #{tpu_custom_call.1} parent=5 // pred_check
        _
      $region38: #{tpu_custom_call.1} parent=5 // pred_check_branch
        %323 = sbr.rel (%p320) target = $region40
      $region39: #{tpu_custom_call.1} parent=5 // pred_region
        %s324 = ssub.s32 %s23, 1
        %s325 = sand.u32 %s50, 1
        %s326 = scalar_lea.sflag [#allocation3], %s325
        %s327 = sand.u32 %s50, 1
        %s328 = smul.addr %s327, 16
        %s329 = scalar_lea.vmem [#allocation2], %s328
        // Predicated region
        $region41: #{tpu_custom_call.1} parent=39 // pred_check
          %p330 = pneg %p63
        $region42: #{tpu_custom_call.1} parent=39 // pred_check_branch
          %332 = sbr.rel (%p330) target = $region44
        $region43: #{tpu_custom_call.1} parent=39 // pred_region
          %334 = dma.done %s326, 256
        $region44: #{tpu_custom_call.1} parent=39 // pred_fallthru
          _
        %s335 = sand.u32 %s28, 1
        %s336 = scalar_lea.sflag [#allocation6], %s335
        %s337 = sand.u32 %s76, 1
        %s338 = smul.addr %s337, 32
        %s339 = scalar_lea.vmem [#allocation5], %s338
        // Predicated region
        $region45: #{tpu_custom_call.1} parent=39 // pred_check
          %p340 = pneg %p89
        $region46: #{tpu_custom_call.1} parent=39 // pred_check_branch
          %342 = sbr.rel (%p340) target = $region48
        $region47: #{tpu_custom_call.1} parent=39 // pred_region
          %344 = dma.done %s336, 512
        $region48: #{tpu_custom_call.1} parent=39 // pred_fallthru
          _
        %s345 = sand.u32 %s28, 1
        %s346 = scalar_lea.sflag [#allocation6], %s345
        %s347 = sand.u32 %s102, 1
        %s348 = scalar_lea.vmem [#allocation7], %s347
        // Predicated region
        $region49: #{tpu_custom_call.1} parent=39 // pred_check
          %p349 = pneg %p115
        $region50: #{tpu_custom_call.1} parent=39 // pred_check_branch
          %351 = sbr.rel (%p349) target = $region52
        $region51: #{tpu_custom_call.1} parent=39 // pred_region
          %353 = dma.done %s346, 16
        $region52: #{tpu_custom_call.1} parent=39 // pred_fallthru
          _
        %s354 = sand.u32 %s28, 1
        %s355 = scalar_lea.sflag [#allocation9], %s354
        %s356 = sand.u32 %s128, 1
        %s357 = smul.addr %s356, 256
        %s358 = scalar_lea.vmem [#allocation8], %s357
        // Predicated region
        $region53: #{tpu_custom_call.1} parent=39 // pred_check
          %p359 = pneg %p141
        $region54: #{tpu_custom_call.1} parent=39 // pred_check_branch
          %361 = sbr.rel (%p359) target = $region56
        $region55: #{tpu_custom_call.1} parent=39 // pred_region
          %363 = dma.done %s355, 4096
        $region56: #{tpu_custom_call.1} parent=39 // pred_fallthru
          _
        %s364 = sand.u32 %s28, 1
        %s365 = scalar_lea.sflag [#allocation9], %s364
        %s366 = sand.u32 %s154, 1
        %s367 = smul.addr %s366, 2
        %s368 = scalar_lea.vmem [#allocation10], %s367
        // Predicated region
        $region57: #{tpu_custom_call.1} parent=39 // pred_check
          %p369 = pneg %p167
        $region58: #{tpu_custom_call.1} parent=39 // pred_check_branch
          %371 = sbr.rel (%p369) target = $region60
        $region59: #{tpu_custom_call.1} parent=39 // pred_region
          %373 = dma.done %s365, 32
        $region60: #{tpu_custom_call.1} parent=39 // pred_fallthru
          _
        %s374 = sand.u32 %s50, 1
        %s375 = scalar_lea.sflag [#allocation3], %s374
        %s376 = sand.u32 %s50, 1
        %s377 = smul.addr %s376, 16
        %s378 = scalar_lea.vmem [#allocation2], %s377
        %p379 = pneg %p63
        %p380 = pneg %p60
        %s381 = sand.u32 %s28, 1
        %s382 = scalar_lea.sflag [#allocation6], %s381
        %s383 = sand.u32 %s76, 1
        %s384 = smul.addr %s383, 32
        %s385 = scalar_lea.vmem [#allocation5], %s384
        %p386 = pneg %p89
        %p387 = pneg %p86
        %s388 = sand.u32 %s28, 1
        %s389 = scalar_lea.sflag [#allocation6], %s388
        %s390 = sand.u32 %s102, 1
        %s391 = scalar_lea.vmem [#allocation7], %s390
        %p392 = pneg %p115
        %p393 = pneg %p112
        %s394 = sand.u32 %s28, 1
        %s395 = scalar_lea.sflag [#allocation9], %s394
        %s396 = sand.u32 %s128, 1
        %s397 = smul.addr %s396, 256
        %s398 = scalar_lea.vmem [#allocation8], %s397
        %p399 = pneg %p141
        %p400 = pneg %p138
        %s401 = sand.u32 %s28, 1
        %s402 = scalar_lea.sflag [#allocation9], %s401
        %s403 = sand.u32 %s154, 1
        %s404 = smul.addr %s403, 2
        %s405 = scalar_lea.vmem [#allocation10], %s404
        %p406 = pneg %p167
        %p407 = pneg %p164
        %p408 = pneg %p195
        %p409 = pneg %p192
        %s410 = sand.u32 %s182, 1
        %s411 = scalar_lea.sflag [#allocation4], %s410
        %s412 = sand.u32 %s182, 1
        %s413 = smul.addr %s412, 16
        %s414 = scalar_lea.vmem [#allocation11], %s413
        %s415 = smul.u32 2, %s33
        %s416 = smul.u32 2, %s33
        %v417 = vld [vmem:[%s329] sm:$0xff]
        %v418 = vld [vmem:[%s329 + $0x8] sm:$0xff]
        %v419 = vld [vmem:[%s339] sm:$0xff]
        %v420 = vld [vmem:[%s339 + $0x8] sm:$0xff]
        %v421 = vld [vmem:[%s339 + $0x10] sm:$0xff]
        %v422 = vld [vmem:[%s339 + $0x18] sm:$0xff]
        %v423 = vld [vmem:[%s348] sm:$0x1]
        %v425 = vperm.slane %v423, 0
        %vm427 = vcmask 261120
        %v429 = vsel %vm427, %v417, 0
        %v432 = vsel %vm427, %v418, 0
        %434 = vmatpush.msra.mxu0 0.0
        %435 = vmatpush.msra.mxu0 0.0
        %436 = vmatpush.msra.mxu0 0.0
        %437 = vmatpush.msra.mxu0 0.0
        %438 = vmatpush.msra.mxu0 0.0
        %439 = vmatpush.msra.mxu0 0.0
        %440 = vmatpush.msra.mxu0 0.0
        %441 = vmatpush.msra.mxu0 0.0
        %442 = vmatpush.msra.mxu0 0.0
        %443 = vmatpush.msra.mxu0 0.0
        %444 = vmatpush.msra.mxu0 0.0
        %445 = vmatpush.msra.mxu0 0.0
        %446 = vmatpush.msra.mxu0 %v422
        %447 = vmatpush.msra.mxu0 %v421
        %448 = vmatpush.msra.mxu0 %v420
        %449 = vmatpush.msra.mxu0 %v419
        %450 = vmatmul.f32.gmra.mxu0 %v429
        %v451 = vpop.f32.mrf.mxu0
        %v452 = vadd.f32 %v425, %v451
        %453 = vmatmul.f32.gmra.mxu0 %v432
        %v454 = vpop.f32.mrf.mxu0
        %v455 = vadd.f32 %v425, %v454
        %456 = vdwg.mxu0
        %v457 = vtanh.pop %v452
        %v458 = vtanh.pop %v455
        %v459 = vld [vmem:[%s358] sm:$0xff]
        %v460 = vld [vmem:[%s358 + $0x8] sm:$0xff]
        %v461 = vld [vmem:[%s358 + $0x10] sm:$0xff]
        %v462 = vld [vmem:[%s358 + $0x18] sm:$0xff]
        %v463 = vld [vmem:[%s358 + $0x20] sm:$0xff]
        %v464 = vld [vmem:[%s358 + $0x28] sm:$0xff]
        %v465 = vld [vmem:[%s358 + $0x30] sm:$0xff]
        %v466 = vld [vmem:[%s358 + $0x38] sm:$0xff]
        %v467 = vld [vmem:[%s358 + $0x40] sm:$0xff]
        %v468 = vld [vmem:[%s358 + $0x48] sm:$0xff]
        %v469 = vld [vmem:[%s358 + $0x50] sm:$0xff]
        %v470 = vld [vmem:[%s358 + $0x58] sm:$0xff]
        %v471 = vld [vmem:[%s358 + $0x60] sm:$0xff]
        %v472 = vld [vmem:[%s358 + $0x68] sm:$0xff]
        %v473 = vld [vmem:[%s358 + $0x70] sm:$0xff]
        %v474 = vld [vmem:[%s358 + $0x78] sm:$0xff]
        %v475 = vld [vmem:[%s358 + $0x80] sm:$0xff]
        %v476 = vld [vmem:[%s358 + $0x88] sm:$0xff]
        %v477 = vld [vmem:[%s358 + $0x90] sm:$0xff]
        %v478 = vld [vmem:[%s358 + $0x98] sm:$0xff]
        %v479 = vld [vmem:[%s358 + $0xa0] sm:$0xff]
        %v480 = vld [vmem:[%s358 + $0xa8] sm:$0xff]
        %v481 = vld [vmem:[%s358 + $0xb0] sm:$0xff]
        %v482 = vld [vmem:[%s358 + $0xb8] sm:$0xff]
        %v483 = vld [vmem:[%s358 + $0xc0] sm:$0xff]
        %v484 = vld [vmem:[%s358 + $0xc8] sm:$0xff]
        %v485 = vld [vmem:[%s358 + $0xd0] sm:$0xff]
        %v486 = vld [vmem:[%s358 + $0xd8] sm:$0xff]
        %v487 = vld [vmem:[%s358 + $0xe0] sm:$0xff]
        %v488 = vld [vmem:[%s358 + $0xe8] sm:$0xff]
        %v489 = vld [vmem:[%s358 + $0xf0] sm:$0xff]
        %v490 = vld [vmem:[%s358 + $0xf8] sm:$0xff]
        %v491 = vld [vmem:[%s368] sm:$0x3]
        %v493 = vperm.slane %v491, 0
        %v494 = vperm.slane %v491, 1
        %497 = vmatpush.msra.mxu0 %v489
        %498 = vmatpush.msra.mxu0 %v487
        %499 = vmatpush.msra.mxu0 %v485
        %500 = vmatpush.msra.mxu0 %v483
        %501 = vmatpush.msra.mxu0 %v481
        %502 = vmatpush.msra.mxu0 %v479
        %503 = vmatpush.msra.mxu0 %v477
        %504 = vmatpush.msra.mxu0 %v475
        %505 = vmatpush.msra.mxu0 %v473
        %506 = vmatpush.msra.mxu0 %v471
        %507 = vmatpush.msra.mxu0 %v469
        %508 = vmatpush.msra.mxu0 %v467
        %509 = vmatpush.msra.mxu0 %v465
        %510 = vmatpush.msra.mxu0 %v463
        %511 = vmatpush.msra.mxu0 %v461
        %512 = vmatpush.msra.mxu0 %v459
        %513 = vmatmul.f32.gmra.mxu0 %v457
        %v514 = vpop.f32.mrf.mxu0
        %v515 = vadd.f32 %v493, %v514
        %516 = vmatmul.f32.gmra.mxu0 %v458
        %v517 = vpop.f32.mrf.mxu0
        %v518 = vadd.f32 %v493, %v517
        %519 = vdwg.mxu0
        %520 = vmatpush.msra.mxu0 %v490
        %521 = vmatpush.msra.mxu0 %v488
        %522 = vmatpush.msra.mxu0 %v486
        %523 = vmatpush.msra.mxu0 %v484
        %524 = vmatpush.msra.mxu0 %v482
        %525 = vmatpush.msra.mxu0 %v480
        %526 = vmatpush.msra.mxu0 %v478
        %527 = vmatpush.msra.mxu0 %v476
        %528 = vmatpush.msra.mxu0 %v474
        %529 = vmatpush.msra.mxu0 %v472
        %530 = vmatpush.msra.mxu0 %v470
        %531 = vmatpush.msra.mxu0 %v468
        %532 = vmatpush.msra.mxu0 %v466
        %533 = vmatpush.msra.mxu0 %v464
        %534 = vmatpush.msra.mxu0 %v462
        %535 = vmatpush.msra.mxu0 %v460
        %536 = vmatmul.f32.gmra.mxu0 %v457
        %v537 = vpop.f32.mrf.mxu0
        %v538 = vadd.f32 %v494, %v537
        %539 = vmatmul.f32.gmra.mxu0 %v458
        %v540 = vpop.f32.mrf.mxu0
        %v541 = vadd.f32 %v494, %v540
        %542 = vdwg.mxu0
        %v543 = vxor.u32 %v538, 2147483648
        %v544 = vxor.u32 %v541, 2147483648
        %v545 = vmul.f32 %v543, 1.442695
        %v546 = vpow.pop %v545
        %v547 = vmul.f32 %v544, 1.442695
        %v548 = vpow.pop %v547
        %v549 = vadd.f32 %v546, 1.0
        %v550 = vadd.f32 %v548, 1.0
        %v551 = vrcp.pop %v549
        %v552 = vmul.f32 %v549, %v551
        %v553 = vsub.f32 1.0, %v552
        %v554 = vmul.f32 %v551, %v553
        %v555 = vadd.f32 %v551, %v554
        %vm556 = vweird.f32 %v549
        %vm557 = vweird.f32 %v551
        %vm558 = vmor %vm556, %vm557
        %v559 = vsel %vm558, %v551, %v555
        %v560 = vand.u32 2147483647, %v549
        %vm561 = vcmp.eq.f32.partialorder %v560, 8.507059e+37
        %v562 = vand.u32 %v549, 2147483648
        %v563 = vor.u32 1.1754944e-38, %v562
        %v564 = vsel %vm561, %v563, %v559
        %v565 = vmul.f32 1.0, %v564
        %v566 = vrcp.pop %v550
        %v567 = vmul.f32 %v550, %v566
        %v568 = vsub.f32 1.0, %v567
        %v569 = vmul.f32 %v566, %v568
        %v570 = vadd.f32 %v566, %v569
        %vm571 = vweird.f32 %v550
        %vm572 = vweird.f32 %v566
        %vm573 = vmor %vm571, %vm572
        %v574 = vsel %vm573, %v566, %v570
        %v575 = vand.u32 2147483647, %v550
        %vm576 = vcmp.eq.f32.partialorder %v575, 8.507059e+37
        %v577 = vand.u32 %v550, 2147483648
        %v578 = vor.u32 1.1754944e-38, %v577
        %v579 = vsel %vm576, %v578, %v574
        %v580 = vmul.f32 1.0, %v579
        %v581 = vmul.f32 %v515, %v565
        %v582 = vmul.f32 %v518, %v580
        %583 = vst [vmem:[%s414] sm:$0xff] %v581
        %584 = vst [vmem:[%s414 + $0x8] sm:$0xff] %v582
        %s585 = sand.u32 %s182, 1
        %s586 = scalar_lea.sflag [#allocation4], %s585
        %s587 = sand.u32 %s182, 1
        %s588 = smul.addr %s587, 16
        %s589 = scalar_lea.vmem [#allocation11], %s588
        // Predicated region
        $region61: #{tpu_custom_call.1} parent=39 // pred_check
          %p590 = pneg %p192
        $region62: #{tpu_custom_call.1} parent=39 // pred_check_branch
          %592 = sbr.rel (%p590) target = $region64
        $region63: #{tpu_custom_call.1} parent=39 // pred_region
          %s593 = smul.u32 2, %s33
          %595 = vsyncadd %s586, 0
          %s596 = smul.addr %s32, 2
          %s597 = sadd.s32 %s593, %s596
          %s598 = smul.addr %s597, 8
          %s599 = scalar_lea.hbm %s5, %s598
          %s600 = sshll.u32 %s589, 4
          %s601 = int_to_ptr.vmem [resolvable:$true] %s600
          %s602 = sshll.u32 %s599, 4
          %s603 = int_to_ptr.hbm [resolvable:$true] %s602
          %608 = dma.vmem_to_hbm [thread:$0]  %s601, 256, %s603, %s586, 128, 128, 8
        $region64: #{tpu_custom_call.1} parent=39 // pred_fallthru
          _
      $region40: #{tpu_custom_call.1} parent=5 // pred_fallthru
        _
      %p609 = scmp.le.s32.totalorder 2, %s23
      // Predicated region
      $region65: #{tpu_custom_call.1} parent=5 // pred_check
        %p610 = pneg %p609
      $region66: #{tpu_custom_call.1} parent=5 // pred_check_branch
        %612 = sbr.rel (%p610) target = $region68
      $region67: #{tpu_custom_call.1} parent=5 // pred_region
        %s613 = ssub.s32 %s23, 2
        // Predicated region
        $region69: #{tpu_custom_call.1} parent=67 // pred_check
          %p614 = pneg %p198
        $region70: #{tpu_custom_call.1} parent=67 // pred_check_branch
          %616 = sbr.rel (%p614) target = $region72
        $region71: #{tpu_custom_call.1} parent=67 // pred_region
          %s617 = sand.u32 %s183, 1
          %s618 = scalar_lea.sflag [#allocation4], %s617
          %s619 = sand.u32 %s183, 1
          %s620 = smul.addr %s619, 16
          %s621 = scalar_lea.vmem [#allocation11], %s620
          %623 = dma.done %s618, 256
        $region72: #{tpu_custom_call.1} parent=67 // pred_fallthru
          _
      $region68: #{tpu_custom_call.1} parent=5 // pred_fallthru
        _
    $region6: #{tpu_custom_call.1} parent=1 // loop_footer
      %s27 = sadd.s32 1, %s23
    $region7: #{tpu_custom_call.1} parent=1 // loop_footer_branch
      %22 = sbr.rel target = $region3
    $region8: #{tpu_custom_call.1} parent=1 // loop_exit
      _
    %624 = vsyncpa [#allocation3], 1
    %s625 = scalar_lea.sflag [#allocation3], 1
    %626 = vsyncpa %s625, 1
    %627 = vsyncpa [#allocation6], 1
    %s628 = scalar_lea.sflag [#allocation6], 1
    %629 = vsyncpa %s628, 1
    %630 = vsyncpa [#allocation9], 1
    %s631 = scalar_lea.sflag [#allocation9], 1
    %632 = vsyncpa %s631, 1
    %633 = vsyncpa [#allocation4], 1
    %s634 = scalar_lea.sflag [#allocation4], 1
    %635 = vsyncpa %s634, 1

</llo_original>
